<compile_context>
chip_gen: v7x
topology: tpu7x:2x2x1
jax: 0.10.0
libtpu: 0.0.40
codegen_flags: <defaults>
</compile_context>

<pallas_src>
import functools

import jax
import jax.numpy as jnp
from jax.experimental import pallas as pl
from jax.experimental.pallas import tpu as pltpu

_LANE = 128      # vreg lane width  -> last-dim alignment
_SUBLANE = 8     # vreg sublane cnt -> second-to-last-dim alignment


def _round_up(x, m):
    return (x + m - 1) // m * m


# ----------------------------------------------------------------------------- kernel
def _fused_mlp_kernel(x_ref, w_ref, b_ref, o_ref, *, num_layers):
    """One row-tile of the full MLP.

    x_ref: (TM, F_pad)            input row tile
    w_ref: (L, F_pad, F_pad)      all layer weights, pre-transposed to (in, out), zero-padded
    b_ref: (L, 1, F_pad)          all layer biases, zero-padded
    o_ref: (TM, F_pad)            output row tile (only first `output_size` lanes meaningful)
    """
    act = x_ref[...].astype(jnp.float32)
    for layer in range(num_layers):          # static unrolled loop over layers
        w = w_ref[layer]                     # (F_pad, F_pad)
        b = b_ref[layer]                     # (1, F_pad) -> broadcasts over rows
        act = jnp.dot(act, w, preferred_element_type=jnp.float32) + b
    o_ref[...] = act.astype(o_ref.dtype)


def fused_mlp(x_padded, w_stack, b_stack, *, tile_m):
    """Run the whole MLP in one pallas_call, tiled over rows only."""
    n_pad, f_pad = x_padded.shape
    num_layers = w_stack.shape[0]
    grid_m = n_pad // tile_m
    kernel = functools.partial(_fused_mlp_kernel, num_layers=num_layers)
    return pl.pallas_call(
        kernel,
        out_shape=jax.ShapeDtypeStruct((n_pad, f_pad), x_padded.dtype),
        grid_spec=pltpu.PrefetchScalarGridSpec(
            num_scalar_prefetch=0,
            grid=(grid_m,),
            in_specs=[
                # Row tile of the activation.
                pl.BlockSpec((tile_m, f_pad), lambda i: (i, 0)),
                # Full weight / bias stacks; constant block index -> DMA'd once,
                # resident in VMEM for every row tile.
                pl.BlockSpec((num_layers, f_pad, f_pad), lambda i: (0, 0, 0)),
                pl.BlockSpec((num_layers, 1, f_pad), lambda i: (0, 0, 0)),
            ],
            out_specs=pl.BlockSpec((tile_m, f_pad), lambda i: (i, 0)),
        ),
        compiler_params=pltpu.CompilerParams(
            # Row tiles are independent -> shard across TensorCores where available.
            dimension_semantics=("parallel",),
        ),
    )(x_padded, w_stack, b_stack)


# ----------------------------------------------------------------------------- params
def init_mlp_params(key, input_size, hidden_size, num_hidden_layers, output_size):
    """Deterministic init mirroring nn.Linear default (uniform +/- 1/sqrt(fan_in)).

    Weights are stored PyTorch-style as (out, in); prepare_params() transposes/pads once.
    """
    if num_hidden_layers == 0:
        dims = [(input_size, output_size)]
    else:
        dims = [(input_size, hidden_size)]
        dims += [(hidden_size, hidden_size)] * (num_hidden_layers - 1)
        dims += [(hidden_size, output_size)]

    params = []
    for (fan_in, fan_out) in dims:
        key, kw, kb = jax.random.split(key, 3)
        bound = 1.0 / jnp.sqrt(fan_in)
        w = jax.random.uniform(kw, (fan_out, fan_in), jnp.float32, -bound, bound)
        b = jax.random.uniform(kb, (fan_out,), jnp.float32, -bound, bound)
        params.append((w, b))
    return params


def prepare_params(params, f_pad, dtype=jnp.float32):
    """One-time (outside the hot path): transpose (out,in)->(in,out), zero-pad to
    (f_pad, f_pad), and stack all layers so the kernel sees a single weight slab."""
    ws, bs = [], []
    for (w, b) in params:
        f_out, f_in = w.shape
        wt = jnp.zeros((f_pad, f_pad), dtype).at[:f_in, :f_out].set(w.T.astype(dtype))
        bp = jnp.zeros((1, f_pad), dtype).at[0, :f_out].set(b.astype(dtype))
        ws.append(wt)
        bs.append(bp)
    return jnp.stack(ws), jnp.stack(bs)


# ----------------------------------------------------------------------------- forward
@functools.partial(jax.jit, static_argnames=("output_size",))
def mlp_forward(x, w_stack, b_stack, *, output_size):
    n, f_in = x.shape
    f_pad = w_stack.shape[-1]
    # Row tiling: up to 256 rows per grid step, padded to a sublane multiple.
    tile_m = min(256, _round_up(n, _SUBLANE))
    n_pad = _round_up(n, tile_m)
    # Lane-dense, zero-padded input slab. Padded input lanes hit zero weight rows,
    # so they contribute nothing.
    x_p = jnp.zeros((n_pad, f_pad), x.dtype).at[:n, :f_in].set(x)
    y_p = fused_mlp(x_p, w_stack, b_stack, tile_m=tile_m)
    return y_p[:n, :output_size]


def mlp_reference(x, params):
    for (w, b) in params:
        x = x @ w.T + b
    return x


# ----------------------------------------------------------------------------- main
if __name__ == "__main__":
    # Shapes consistent with the module: MLP(input=16, hidden=32, layers=2, out=8)
    input_size, hidden_size, num_hidden_layers, output_size = 16, 32, 2, 8
    batch = 8

    key = jax.random.PRNGKey(0)
    key, kx = jax.random.split(key)
    x = jax.random.normal(kx, (batch, input_size), jnp.float32)

    params = init_mlp_params(key, input_size, hidden_size,
                             num_hidden_layers, output_size)

    # Common padded feature width (all layer dims fit in one lane-aligned slab).
    feat_dims = [input_size, output_size]
    if num_hidden_layers > 0:
        feat_dims.append(hidden_size)
    f_pad = _round_up(max(feat_dims), _LANE)

    w_stack, b_stack = prepare_params(params, f_pad)

    y = mlp_forward(x, w_stack, b_stack, output_size=output_size)
    jax.block_until_ready(y)

    y_ref = mlp_reference(x, params)
    assert y.shape == (batch, output_size), y.shape
    assert jnp.allclose(y, y_ref, atol=1e-5, rtol=1e-5), "mismatch vs reference"

    print("KERNEL_OK")
</pallas_src>

<mosaic_0001>
module attributes {stable_mosaic.version = 11 : i64} {
  func.func @_fused_mlp_kernel(%arg0: i32, %arg1: memref<8x128xf32, #tpu.memory_space<vmem>>, %arg2: memref<3x128x128xf32, #tpu.memory_space<vmem>>, %arg3: memref<3x1x128xf32, #tpu.memory_space<vmem>>, %arg4: memref<8x128xf32, #tpu.memory_space<vmem>>) attributes {dimension_semantics = [#tpu.dimension_semantics<parallel>], iteration_bounds = array<i64: 1>, scalar_prefetch = 0 : i64, scratch_operands = 0 : i64, tpu.core_type = #tpu.core_type<tc>, window_params = [{transform_indices = @transform_0, window_bounds = array<i64: 8, 128>}, {pipeline_mode = #tpu.pipeline_mode<synchronous>, transform_indices = @transform_1, window_bounds = array<i64: 3, 128, 128>}, {pipeline_mode = #tpu.pipeline_mode<synchronous>, transform_indices = @transform_2, window_bounds = array<i64: 3, 1, 128>}, {transform_indices = @transform_3, window_bounds = array<i64: 8, 128>}]} {
    %c0 = arith.constant 0 : index
    %c0_0 = arith.constant 0 : index
    %0 = vector.load %arg1[%c0, %c0_0] : memref<8x128xf32, #tpu.memory_space<vmem>>, vector<8x128xf32>
    %c0_1 = arith.constant 0 : index
    %c0_2 = arith.constant 0 : index
    %c0_3 = arith.constant 0 : index
    %1 = vector.load %arg2[%c0_1, %c0_2, %c0_3] : memref<3x128x128xf32, #tpu.memory_space<vmem>>, vector<1x128x128xf32>
    %2 = vector.shape_cast %1 : vector<1x128x128xf32> to vector<128x128xf32>
    %c0_4 = arith.constant 0 : index
    %c0_5 = arith.constant 0 : index
    %c0_6 = arith.constant 0 : index
    %3 = vector.load %arg3[%c0_4, %c0_5, %c0_6] : memref<3x1x128xf32, #tpu.memory_space<vmem>>, vector<1x1x128xf32>
    %4 = vector.shape_cast %3 : vector<1x1x128xf32> to vector<1x128xf32>
    %cst = arith.constant dense<0.000000e+00> : vector<8x128xf32>
    %5 = tpu.matmul %0, %2, %cst {dimension_numbers = #tpu.dot_dimension_numbers<[1], [0], [0], [1], [0, 0, 1, 1], [], []>} : vector<8x128xf32>, vector<128x128xf32>, vector<8x128xf32> -> vector<8x128xf32>
    %6 = vector.broadcast %4 : vector<1x128xf32> to vector<8x128xf32>
    %7 = arith.addf %5, %6 : vector<8x128xf32>
    %c1 = arith.constant 1 : index
    %c0_7 = arith.constant 0 : index
    %c0_8 = arith.constant 0 : index
    %8 = vector.load %arg2[%c1, %c0_7, %c0_8] : memref<3x128x128xf32, #tpu.memory_space<vmem>>, vector<1x128x128xf32>
    %9 = vector.shape_cast %8 : vector<1x128x128xf32> to vector<128x128xf32>
    %c1_9 = arith.constant 1 : index
    %c0_10 = arith.constant 0 : index
    %c0_11 = arith.constant 0 : index
    %10 = vector.load %arg3[%c1_9, %c0_10, %c0_11] : memref<3x1x128xf32, #tpu.memory_space<vmem>>, vector<1x1x128xf32>
    %11 = vector.shape_cast %10 : vector<1x1x128xf32> to vector<1x128xf32>
    %cst_12 = arith.constant dense<0.000000e+00> : vector<8x128xf32>
    %12 = tpu.matmul %7, %9, %cst_12 {dimension_numbers = #tpu.dot_dimension_numbers<[1], [0], [0], [1], [0, 0, 1, 1], [], []>} : vector<8x128xf32>, vector<128x128xf32>, vector<8x128xf32> -> vector<8x128xf32>
    %13 = vector.broadcast %11 : vector<1x128xf32> to vector<8x128xf32>
    %14 = arith.addf %12, %13 : vector<8x128xf32>
    %c2 = arith.constant 2 : index
    %c0_13 = arith.constant 0 : index
    %c0_14 = arith.constant 0 : index
    %15 = vector.load %arg2[%c2, %c0_13, %c0_14] : memref<3x128x128xf32, #tpu.memory_space<vmem>>, vector<1x128x128xf32>
    %16 = vector.shape_cast %15 : vector<1x128x128xf32> to vector<128x128xf32>
    %c2_15 = arith.constant 2 : index
    %c0_16 = arith.constant 0 : index
    %c0_17 = arith.constant 0 : index
    %17 = vector.load %arg3[%c2_15, %c0_16, %c0_17] : memref<3x1x128xf32, #tpu.memory_space<vmem>>, vector<1x1x128xf32>
    %18 = vector.shape_cast %17 : vector<1x1x128xf32> to vector<1x128xf32>
    %cst_18 = arith.constant dense<0.000000e+00> : vector<8x128xf32>
    %19 = tpu.matmul %14, %16, %cst_18 {dimension_numbers = #tpu.dot_dimension_numbers<[1], [0], [0], [1], [0, 0, 1, 1], [], []>} : vector<8x128xf32>, vector<128x128xf32>, vector<8x128xf32> -> vector<8x128xf32>
    %20 = vector.broadcast %18 : vector<1x128xf32> to vector<8x128xf32>
    %21 = arith.addf %19, %20 : vector<8x128xf32>
    %c0_19 = arith.constant 0 : index
    %c0_20 = arith.constant 0 : index
    %22 = vector.load %arg4[%c0_19, %c0_20] : memref<8x128xf32, #tpu.memory_space<vmem>>, vector<8x128xf32>
    tpu.vector_store %arg4[%c0_19, %c0_20], %21 {strides = array<i32>} : memref<8x128xf32, #tpu.memory_space<vmem>>, vector<8x128xf32>,
    return
  }
  func.func @transform_0(%arg0: i32) -> (i32, i32) {
    %c0_i32 = arith.constant 0 : i32
    %c0_i32_0 = arith.constant 0 : i32
    return %arg0, %c0_i32 : i32, i32
  }
  func.func @transform_1(%arg0: i32) -> (i32, i32, i32) {
    %c0_i32 = arith.constant 0 : i32
    %c0_i32_0 = arith.constant 0 : i32
    %c0_i32_1 = arith.constant 0 : i32
    %c0_i32_2 = arith.constant 0 : i32
    return %c0_i32, %c0_i32_0, %c0_i32_1 : i32, i32, i32
  }
  func.func @transform_2(%arg0: i32) -> (i32, i32, i32) {
    %c0_i32 = arith.constant 0 : i32
    %c0_i32_0 = arith.constant 0 : i32
    %c0_i32_1 = arith.constant 0 : i32
    %c0_i32_2 = arith.constant 0 : i32
    return %c0_i32, %c0_i32_0, %c0_i32_1 : i32, i32, i32
  }
  func.func @transform_3(%arg0: i32) -> (i32, i32) {
    %c0_i32 = arith.constant 0 : i32
    %c0_i32_0 = arith.constant 0 : i32
    return %arg0, %c0_i32 : i32, i32
  }
}

</mosaic_0001>

<llo_original>
// kernel: mlp_forward.1
$region0: #{mlp_forward.1}
  #allocation0 [shape = 'u32[]', space=smem, size = 0x4, offset = 0x4, fixed_abs, tag = 'smem constant byte address 0x4 - core index']
  #allocation1 [shape = 'u32[144,128]{1,0:T(1,128)}', space=vmem, size = 0x12000, scoped, tag = 'internal scratch']
  %s0 = inlined_call_operand.vmem [shape: f32[8,128], index: 0, kind: input, shape index: {}]
  %s1 = inlined_call_operand.hbm [shape: f32[3,128,128], index: 1, kind: input, shape index: {}]
  %s2 = inlined_call_operand.vmem [shape: f32[3,1,128], index: 2, kind: input, shape index: {}]
  %s3 = inlined_call_operand.hbm [shape: f32[8,128], index: 3, kind: output, shape index: {}]
  %s4 = sld [smem:[#allocation0]]
  $region26: #{mlp_forward.1} parent=0
    _
  %s6 = ssub.s32 1, %s4
  %s7 = scalar_select 0, %s6, %s4
  $region1: #{mlp_forward.1} parent=0
    #allocation2 [shape = 'u8[196608]{0}', space=vmem, size = 0x30000, scoped, tag = 'input window, operand 1, single buffered']
    #allocation3 [shape = 's32[1]{0}', space=sflag, size = 0x4, scoped, tag = 'scoped memory for mlp_forward.1']
    #allocation4 [shape = 's32[1]{0}', space=sflag, size = 0x4, scoped, tag = 'scoped memory for mlp_forward.1']
    #allocation5 [shape = 'u8[4096]{0}', space=vmem, size = 0x1000, scoped, tag = 'output window, operand 0, single buffered']
    %8 = vsyncpa [#allocation3], 0
    %9 = vsyncpa [#allocation4], 0
    // Predicated region
    $region2: #{mlp_forward.1} parent=1 // pred_check
      _
    $region3: #{mlp_forward.1} parent=1 // pred_check_branch
      %11 = sbr.rel (0) target = $region5
    $region4: #{mlp_forward.1} parent=1 // pred_region
      _
    $region5: #{mlp_forward.1} parent=1 // pred_fallthru
      _
    // Predicated region
    $region6: #{mlp_forward.1} parent=1 // pred_check
      _
    $region7: #{mlp_forward.1} parent=1 // pred_check_branch
      %13 = sbr.rel (0) target = $region9
    $region8: #{mlp_forward.1} parent=1 // pred_region
      %s15 = ssub.s32 6144, 6144
      %16 = vsyncadd [#allocation3], %s15
      %s17 = sshll.u32 [#allocation2], 4
      %s18 = int_to_ptr.vmem [resolvable:$true] %s17
      %23 = dma.hbm_to_vmem [thread:$0]  %s1, 6144, %s18, [#allocation3], 128, 128, 8
    $region9: #{mlp_forward.1} parent=1 // pred_fallthru
      _
    // Predicated region
    $region10: #{mlp_forward.1} parent=1 // pred_check
      _
    $region11: #{mlp_forward.1} parent=1 // pred_check_branch
      %25 = sbr.rel (0) target = $region13
    $region12: #{mlp_forward.1} parent=1 // pred_region
      _
    $region13: #{mlp_forward.1} parent=1 // pred_fallthru
      _
    // Predicated region
    $region14: #{mlp_forward.1} parent=1 // pred_check
      _
    $region15: #{mlp_forward.1} parent=1 // pred_check_branch
      %27 = sbr.rel (0) target = $region17
    $region16: #{mlp_forward.1} parent=1 // pred_region
      %28 = dma.done [#allocation3], 6144
    $region17: #{mlp_forward.1} parent=1 // pred_fallthru
      _
    %v29 = vld [vmem:[%s0] sm:$0xff]
    %v30 = vld [vmem:[#allocation2] sm:$0xff]
    %v31 = vld [vmem:[#allocation2 + $0x8] sm:$0xff]
    %v32 = vld [vmem:[#allocation2 + $0x10] sm:$0xff]
    %v33 = vld [vmem:[#allocation2 + $0x18] sm:$0xff]
    %v34 = vld [vmem:[#allocation2 + $0x20] sm:$0xff]
    %v35 = vld [vmem:[#allocation2 + $0x28] sm:$0xff]
    %v36 = vld [vmem:[#allocation2 + $0x30] sm:$0xff]
    %v37 = vld [vmem:[#allocation2 + $0x38] sm:$0xff]
    %v38 = vld [vmem:[#allocation2 + $0x40] sm:$0xff]
    %v39 = vld [vmem:[#allocation2 + $0x48] sm:$0xff]
    %v40 = vld [vmem:[#allocation2 + $0x50] sm:$0xff]
    %v41 = vld [vmem:[#allocation2 + $0x58] sm:$0xff]
    %v42 = vld [vmem:[#allocation2 + $0x60] sm:$0xff]
    %v43 = vld [vmem:[#allocation2 + $0x68] sm:$0xff]
    %v44 = vld [vmem:[#allocation2 + $0x70] sm:$0xff]
    %v45 = vld [vmem:[#allocation2 + $0x78] sm:$0xff]
    %v46 = vld [vmem:[%s2] sm:$0x1]
    %v48 = vlaneseq
    %v49 = vshrl.u32 %v48, 7
    %v50 = vsub.s32 0, %v49
    %v51 = vrot.slane %v46, %v50
    %53 = vmatprep.subr.mxu0 0.0
    %54 = vmatpush1.msra.mxu0 %v30
    %55 = vmatprep.subr.mxu0 0.0
    %56 = vmatpush1.msra.mxu0 %v31
    %57 = vmatprep.subr.mxu0 0.0
    %58 = vmatpush1.msra.mxu0 %v32
    %59 = vmatprep.subr.mxu0 0.0
    %60 = vmatpush1.msra.mxu0 %v33
    %61 = vmatprep.subr.mxu0 0.0
    %62 = vmatpush1.msra.mxu0 %v34
    %63 = vmatprep.subr.mxu0 0.0
    %64 = vmatpush1.msra.mxu0 %v35
    %65 = vmatprep.subr.mxu0 0.0
    %66 = vmatpush1.msra.mxu0 %v36
    %67 = vmatprep.subr.mxu0 0.0
    %68 = vmatpush1.msra.mxu0 %v37
    %69 = vmatprep.subr.mxu0 0.0
    %70 = vmatpush1.msra.mxu0 %v38
    %71 = vmatprep.subr.mxu0 0.0
    %72 = vmatpush1.msra.mxu0 %v39
    %73 = vmatprep.subr.mxu0 0.0
    %74 = vmatpush1.msra.mxu0 %v40
    %75 = vmatprep.subr.mxu0 0.0
    %76 = vmatpush1.msra.mxu0 %v41
    %77 = vmatprep.subr.mxu0 0.0
    %78 = vmatpush1.msra.mxu0 %v42
    %79 = vmatprep.subr.mxu0 0.0
    %80 = vmatpush1.msra.mxu0 %v43
    %81 = vmatprep.subr.mxu0 0.0
    %82 = vmatpush1.msra.mxu0 %v44
    %83 = vmatprep.subr.mxu0 0.0
    %84 = vmatpush1.msra.mxu0 %v45
    %85 = vmatprep.subr.mxu0 0.0
    %86 = vmatpush1.msra.mxu0 0.0
    %87 = vmatprep.subr.mxu0 0.0
    %88 = vmatpush1.msra.mxu0 0.0
    %89 = vmatprep.subr.mxu0 0.0
    %90 = vmatpush1.msra.mxu0 0.0
    %91 = vmatprep.subr.mxu0 0.0
    %92 = vmatpush1.msra.mxu0 0.0
    %93 = vmatprep.subr.mxu0 0.0
    %94 = vmatpush1.msra.mxu0 0.0
    %95 = vmatprep.subr.mxu0 0.0
    %96 = vmatpush1.msra.mxu0 0.0
    %97 = vmatprep.subr.mxu0 0.0
    %98 = vmatpush1.msra.mxu0 0.0
    %99 = vmatprep.subr.mxu0 0.0
    %100 = vmatpush1.msra.mxu0 0.0
    %101 = vmatprep.subr.mxu0 0.0
    %102 = vmatpush1.msra.mxu0 0.0
    %103 = vmatprep.subr.mxu0 0.0
    %104 = vmatpush1.msra.mxu0 0.0
    %105 = vmatprep.subr.mxu0 0.0
    %106 = vmatpush1.msra.mxu0 0.0
    %107 = vmatprep.subr.mxu0 0.0
    %108 = vmatpush1.msra.mxu0 0.0
    %109 = vmatprep.subr.mxu0 0.0
    %110 = vmatpush1.msra.mxu0 0.0
    %111 = vmatprep.subr.mxu0 0.0
    %112 = vmatpush1.msra.mxu0 0.0
    %113 = vmatprep.subr.mxu0 0.0
    %114 = vmatpush1.msra.mxu0 0.0
    %115 = vmatprep.subr.mxu0 0.0
    %116 = vmatpush1.msra.mxu0 0.0
    %117 = vmatprep.mubr.f32.mxu0 0.0
    %118 = vmatmul.mubr.f32.gmra.mrb[0].mxu0 %v29
    %v119 = vpop.f32.mrb[0].mxu0
    %v120 = vadd.f32 %v51, %v119
    %v121 = vpop.f32.mrb[0].mxu0
    %122 = vdwg.mxu0
    %s123 = scalar_lea.vmem [#allocation2], 128
    %v124 = vld [vmem:[%s123] sm:$0xff]
    %v125 = vld [vmem:[%s123 + $0x8] sm:$0xff]
    %v126 = vld [vmem:[%s123 + $0x10] sm:$0xff]
    %v127 = vld [vmem:[%s123 + $0x18] sm:$0xff]
    %v128 = vld [vmem:[%s123 + $0x20] sm:$0xff]
    %v129 = vld [vmem:[%s123 + $0x28] sm:$0xff]
    %v130 = vld [vmem:[%s123 + $0x30] sm:$0xff]
    %v131 = vld [vmem:[%s123 + $0x38] sm:$0xff]
    %v132 = vld [vmem:[%s123 + $0x40] sm:$0xff]
    %v133 = vld [vmem:[%s123 + $0x48] sm:$0xff]
    %v134 = vld [vmem:[%s123 + $0x50] sm:$0xff]
    %v135 = vld [vmem:[%s123 + $0x58] sm:$0xff]
    %v136 = vld [vmem:[%s123 + $0x60] sm:$0xff]
    %v137 = vld [vmem:[%s123 + $0x68] sm:$0xff]
    %v138 = vld [vmem:[%s123 + $0x70] sm:$0xff]
    %v139 = vld [vmem:[%s123 + $0x78] sm:$0xff]
    %s140 = scalar_lea.vmem %s2, 1
    %v141 = vld [vmem:[%s140] sm:$0x1]
    %v143 = vlaneseq
    %v144 = vshrl.u32 %v143, 7
    %v145 = vsub.s32 0, %v144
    %v146 = vrot.slane %v141, %v145
    %148 = vmatprep.subr.mxu0 0.0
    %149 = vmatpush1.msra.mxu0 %v124
    %150 = vmatprep.subr.mxu0 0.0
    %151 = vmatpush1.msra.mxu0 %v125
    %152 = vmatprep.subr.mxu0 0.0
    %153 = vmatpush1.msra.mxu0 %v126
    %154 = vmatprep.subr.mxu0 0.0
    %155 = vmatpush1.msra.mxu0 %v127
    %156 = vmatprep.subr.mxu0 0.0
    %157 = vmatpush1.msra.mxu0 %v128
    %158 = vmatprep.subr.mxu0 0.0
    %159 = vmatpush1.msra.mxu0 %v129
    %160 = vmatprep.subr.mxu0 0.0
    %161 = vmatpush1.msra.mxu0 %v130
    %162 = vmatprep.subr.mxu0 0.0
    %163 = vmatpush1.msra.mxu0 %v131
    %164 = vmatprep.subr.mxu0 0.0
    %165 = vmatpush1.msra.mxu0 %v132
    %166 = vmatprep.subr.mxu0 0.0
    %167 = vmatpush1.msra.mxu0 %v133
    %168 = vmatprep.subr.mxu0 0.0
    %169 = vmatpush1.msra.mxu0 %v134
    %170 = vmatprep.subr.mxu0 0.0
    %171 = vmatpush1.msra.mxu0 %v135
    %172 = vmatprep.subr.mxu0 0.0
    %173 = vmatpush1.msra.mxu0 %v136
    %174 = vmatprep.subr.mxu0 0.0
    %175 = vmatpush1.msra.mxu0 %v137
    %176 = vmatprep.subr.mxu0 0.0
    %177 = vmatpush1.msra.mxu0 %v138
    %178 = vmatprep.subr.mxu0 0.0
    %179 = vmatpush1.msra.mxu0 %v139
    %180 = vmatprep.subr.mxu0 0.0
    %181 = vmatpush1.msra.mxu0 0.0
    %182 = vmatprep.subr.mxu0 0.0
    %183 = vmatpush1.msra.mxu0 0.0
    %184 = vmatprep.subr.mxu0 0.0
    %185 = vmatpush1.msra.mxu0 0.0
    %186 = vmatprep.subr.mxu0 0.0
    %187 = vmatpush1.msra.mxu0 0.0
    %188 = vmatprep.subr.mxu0 0.0
    %189 = vmatpush1.msra.mxu0 0.0
    %190 = vmatprep.subr.mxu0 0.0
    %191 = vmatpush1.msra.mxu0 0.0
    %192 = vmatprep.subr.mxu0 0.0
    %193 = vmatpush1.msra.mxu0 0.0
    %194 = vmatprep.subr.mxu0 0.0
    %195 = vmatpush1.msra.mxu0 0.0
    %196 = vmatprep.subr.mxu0 0.0
    %197 = vmatpush1.msra.mxu0 0.0
    %198 = vmatprep.subr.mxu0 0.0
    %199 = vmatpush1.msra.mxu0 0.0
    %200 = vmatprep.subr.mxu0 0.0
    %201 = vmatpush1.msra.mxu0 0.0
    %202 = vmatprep.subr.mxu0 0.0
    %203 = vmatpush1.msra.mxu0 0.0
    %204 = vmatprep.subr.mxu0 0.0
    %205 = vmatpush1.msra.mxu0 0.0
    %206 = vmatprep.subr.mxu0 0.0
    %207 = vmatpush1.msra.mxu0 0.0
    %208 = vmatprep.subr.mxu0 0.0
    %209 = vmatpush1.msra.mxu0 0.0
    %210 = vmatprep.subr.mxu0 0.0
    %211 = vmatpush1.msra.mxu0 0.0
    %212 = vmatprep.mubr.f32.mxu0 0.0
    %213 = vmatmul.mubr.f32.gmra.mrb[0].mxu0 %v120
    %v214 = vpop.f32.mrb[0].mxu0
    %v215 = vadd.f32 %v146, %v214
    %v216 = vpop.f32.mrb[0].mxu0
    %217 = vdwg.mxu0
    %s218 = scalar_lea.vmem [#allocation2], 256
    %v219 = vld [vmem:[%s218] sm:$0xff]
    %v220 = vld [vmem:[%s218 + $0x8] sm:$0xff]
    %v221 = vld [vmem:[%s218 + $0x10] sm:$0xff]
    %v222 = vld [vmem:[%s218 + $0x18] sm:$0xff]
    %v223 = vld [vmem:[%s218 + $0x20] sm:$0xff]
    %v224 = vld [vmem:[%s218 + $0x28] sm:$0xff]
    %v225 = vld [vmem:[%s218 + $0x30] sm:$0xff]
    %v226 = vld [vmem:[%s218 + $0x38] sm:$0xff]
    %v227 = vld [vmem:[%s218 + $0x40] sm:$0xff]
    %v228 = vld [vmem:[%s218 + $0x48] sm:$0xff]
    %v229 = vld [vmem:[%s218 + $0x50] sm:$0xff]
    %v230 = vld [vmem:[%s218 + $0x58] sm:$0xff]
    %v231 = vld [vmem:[%s218 + $0x60] sm:$0xff]
    %v232 = vld [vmem:[%s218 + $0x68] sm:$0xff]
    %v233 = vld [vmem:[%s218 + $0x70] sm:$0xff]
    %v234 = vld [vmem:[%s218 + $0x78] sm:$0xff]
    %s235 = scalar_lea.vmem %s2, 2
    %v236 = vld [vmem:[%s235] sm:$0x1]
    %v238 = vlaneseq
    %v239 = vshrl.u32 %v238, 7
    %v240 = vsub.s32 0, %v239
    %v241 = vrot.slane %v236, %v240
    %243 = vmatprep.subr.mxu0 0.0
    %244 = vmatpush1.msra.mxu0 %v219
    %245 = vmatprep.subr.mxu0 0.0
    %246 = vmatpush1.msra.mxu0 %v220
    %247 = vmatprep.subr.mxu0 0.0
    %248 = vmatpush1.msra.mxu0 %v221
    %249 = vmatprep.subr.mxu0 0.0
    %250 = vmatpush1.msra.mxu0 %v222
    %251 = vmatprep.subr.mxu0 0.0
    %252 = vmatpush1.msra.mxu0 %v223
    %253 = vmatprep.subr.mxu0 0.0
    %254 = vmatpush1.msra.mxu0 %v224
    %255 = vmatprep.subr.mxu0 0.0
    %256 = vmatpush1.msra.mxu0 %v225
    %257 = vmatprep.subr.mxu0 0.0
    %258 = vmatpush1.msra.mxu0 %v226
    %259 = vmatprep.subr.mxu0 0.0
    %260 = vmatpush1.msra.mxu0 %v227
    %261 = vmatprep.subr.mxu0 0.0
    %262 = vmatpush1.msra.mxu0 %v228
    %263 = vmatprep.subr.mxu0 0.0
    %264 = vmatpush1.msra.mxu0 %v229
    %265 = vmatprep.subr.mxu0 0.0
    %266 = vmatpush1.msra.mxu0 %v230
    %267 = vmatprep.subr.mxu0 0.0
    %268 = vmatpush1.msra.mxu0 %v231
    %269 = vmatprep.subr.mxu0 0.0
    %270 = vmatpush1.msra.mxu0 %v232
    %271 = vmatprep.subr.mxu0 0.0
    %272 = vmatpush1.msra.mxu0 %v233
    %273 = vmatprep.subr.mxu0 0.0
    %274 = vmatpush1.msra.mxu0 %v234
    %275 = vmatprep.subr.mxu0 0.0
    %276 = vmatpush1.msra.mxu0 0.0
    %277 = vmatprep.subr.mxu0 0.0
    %278 = vmatpush1.msra.mxu0 0.0
    %279 = vmatprep.subr.mxu0 0.0
    %280 = vmatpush1.msra.mxu0 0.0
    %281 = vmatprep.subr.mxu0 0.0
    %282 = vmatpush1.msra.mxu0 0.0
    %283 = vmatprep.subr.mxu0 0.0
    %284 = vmatpush1.msra.mxu0 0.0
    %285 = vmatprep.subr.mxu0 0.0
    %286 = vmatpush1.msra.mxu0 0.0
    %287 = vmatprep.subr.mxu0 0.0
    %288 = vmatpush1.msra.mxu0 0.0
    %289 = vmatprep.subr.mxu0 0.0
    %290 = vmatpush1.msra.mxu0 0.0
    %291 = vmatprep.subr.mxu0 0.0
    %292 = vmatpush1.msra.mxu0 0.0
    %293 = vmatprep.subr.mxu0 0.0
    %294 = vmatpush1.msra.mxu0 0.0
    %295 = vmatprep.subr.mxu0 0.0
    %296 = vmatpush1.msra.mxu0 0.0
    %297 = vmatprep.subr.mxu0 0.0
    %298 = vmatpush1.msra.mxu0 0.0
    %299 = vmatprep.subr.mxu0 0.0
    %300 = vmatpush1.msra.mxu0 0.0
    %301 = vmatprep.subr.mxu0 0.0
    %302 = vmatpush1.msra.mxu0 0.0
    %303 = vmatprep.subr.mxu0 0.0
    %304 = vmatpush1.msra.mxu0 0.0
    %305 = vmatprep.subr.mxu0 0.0
    %306 = vmatpush1.msra.mxu0 0.0
    %307 = vmatprep.mubr.f32.mxu0 0.0
    %308 = vmatmul.mubr.f32.gmra.mrb[0].mxu0 %v215
    %v309 = vpop.f32.mrb[0].mxu0
    %v310 = vadd.f32 %v241, %v309
    %v311 = vpop.f32.mrb[0].mxu0
    %312 = vdwg.mxu0
    %313 = vst [vmem:[#allocation5] sm:$0xff] %v310
    // Predicated region
    $region18: #{mlp_forward.1} parent=1 // pred_check
      _
    $region19: #{mlp_forward.1} parent=1 // pred_check_branch
      %315 = sbr.rel (0) target = $region21
    $region20: #{mlp_forward.1} parent=1 // pred_region
      %s317 = ssub.s32 128, 128
      %318 = vsyncadd [#allocation4], %s317
      %s320 = sshll.u32 [#allocation5], 4
      %s321 = int_to_ptr.vmem [resolvable:$true] %s320
      %323 = dma.vmem_to_hbm [thread:$0]  %s321, 128, %s3, [#allocation4]
    $region21: #{mlp_forward.1} parent=1 // pred_fallthru
      _
    // Predicated region
    $region22: #{mlp_forward.1} parent=1 // pred_check
      _
    $region23: #{mlp_forward.1} parent=1 // pred_check_branch
      %325 = sbr.rel (0) target = $region25
    $region24: #{mlp_forward.1} parent=1 // pred_region
      %326 = dma.done [#allocation4], 128
    $region25: #{mlp_forward.1} parent=1 // pred_fallthru
      _
    %327 = vsyncpa [#allocation3], 1
    %328 = vsyncpa [#allocation4], 1

</llo_original>
